<compile_context>
chip_gen: v5e
topology: v5e:2x2
jax: 0.10.0
libtpu: 0.0.40
codegen_flags: <defaults>
</compile_context>

<pallas_src>
import jax
import jax.numpy as jnp
from jax.experimental import pallas as pl
from jax.experimental.pallas import tpu as pltpu


def _round_up(v: int, m: int) -> int:
    return ((v + m - 1) // m) * m


def gate_kernel(h_ref, x_ref, wh_ref, wx_ref, b_ref, o_ref, acc_ref):
    """One (tm, tn) output tile, accumulated over the K grid axis."""
    k = pl.program_id(2)

    @pl.when(k == 0)
    def _init():
        # Initialise the f32 accumulator with the (fully VMEM-resident)
        # input-path matmul: x @ W_x.
        acc_ref[...] = jnp.dot(x_ref[...], wx_ref[...],
                               preferred_element_type=jnp.float32)

    # Hidden-path contraction streamed over K (reduction axis, "arbitrary").
    acc_ref[...] += jnp.dot(h_ref[...], wh_ref[...],
                            preferred_element_type=jnp.float32)

    @pl.when(k == pl.num_programs(2) - 1)
    def _finalize():
        z = acc_ref[...] + b_ref[...]          # (1, tn) bias broadcasts over rows
        # sigmoid(z) = 1 / (1 + exp(-z)): exp + approx reciprocal both on the EUP.
        # TODO(synk): activation_function is a constructor arg in PyTorch; sigmoid
        # is hard-wired here.
        e = jnp.exp(-z)
        o_ref[...] = pl.reciprocal(1.0 + e, approx=True).astype(o_ref.dtype)


def prepare_gate_params(input_w, hidden_w, b, *, compute_dtype=jnp.bfloat16):
    """One-time parameter prep (pad + cast). Call once, NOT per forward step."""
    input_dim, hidden_dim = input_w.shape
    assert hidden_w.shape == (hidden_dim, hidden_dim)
    assert b.shape == (hidden_dim,)

    # Output / N tiling: lane-dense multiples of 128, target 256 tiles for the
    # v6e/v7x 256x256 MXU.
    n128 = _round_up(hidden_dim, 128)
    tn = min(256, n128)
    n_pad = _round_up(hidden_dim, tn)

    # Hidden-path contraction (K) tiling: multiples of 128, streamed in <=512
    # chunks so resident weights stay small even on v7x's 64 MiB VMEM.
    kh128 = _round_up(hidden_dim, 128)
    tk = min(512, kh128)
    kh_pad = _round_up(hidden_dim, tk)

    wh = jnp.pad(hidden_w,
                 ((0, kh_pad - hidden_dim), (0, n_pad - hidden_dim))
                 ).astype(compute_dtype)
    wx = jnp.pad(input_w, ((0, 0), (0, n_pad - hidden_dim))).astype(compute_dtype)
    b2d = jnp.pad(b, (0, n_pad - hidden_dim)).reshape(1, n_pad).astype(jnp.float32)

    return dict(wh=wh, wx=wx, b=b2d,
                input_dim=input_dim, hidden_dim=hidden_dim,
                n_pad=n_pad, tn=tn, kh_pad=kh_pad, tk=tk,
                compute_dtype=compute_dtype)


def gate_forward(params, x, h, *, out_dtype=jnp.float32):
    """z = h @ W_h + x @ W_x + b; out = sigmoid(z). Returns (batch, hidden_dim).

    Pass out_dtype=jnp.bfloat16 to halve output HBM writeback if downstream
    tolerates it; default f32 matches the PyTorch module.
    """
    batch = x.shape[0]
    input_dim = params["input_dim"]
    hidden_dim = params["hidden_dim"]
    assert x.shape == (batch, input_dim)
    assert h.shape == (batch, hidden_dim)

    tn, n_pad = params["tn"], params["n_pad"]
    tk, kh_pad = params["tk"], params["kh_pad"]
    cdt = params["compute_dtype"]

    # M (batch) tiling: bf16 packs 16 rows per sublane group -> pad to 16.
    m16 = _round_up(batch, 16)
    tm = min(256, m16)
    m_pad = _round_up(m16, tm)

    # Per-call activation prep is ONLY pad/cast (no concat); the pads are
    # no-ops whenever batch % 16 == 0 and hidden_dim % 128 == 0.
    h_p = h
    if (m_pad != batch) or (kh_pad != hidden_dim):
        h_p = jnp.pad(h, ((0, m_pad - batch), (0, kh_pad - hidden_dim)))
    x_p = x
    if m_pad != batch:
        x_p = jnp.pad(x, ((0, m_pad - batch), (0, 0)))
    h_p = h_p.astype(cdt)
    x_p = x_p.astype(cdt)

    grid = (m_pad // tm, n_pad // tn, kh_pad // tk)

    # VMEM budget from the actual resident footprint (+2x headroom), capped at
    # v7x's 64 MiB physical VMEM.
    bpe = jnp.dtype(cdt).itemsize
    out_bpe = jnp.dtype(out_dtype).itemsize
    resident = (2 * (tm * tk + tk * tn) * bpe                   # h, W_h tiles (double buffered)
                + 2 * (tm * input_dim + input_dim * tn) * bpe   # x, W_x tiles
                + 2 * tn * 4                                    # bias
                + tm * tn * 4                                   # f32 accumulator scratch
                + 2 * tm * tn * out_bpe)                        # output tile
    vmem_limit = int(min(max(2 * resident + (1 << 20), 4 << 20), 64 << 20))

    flops = 2 * m_pad * kh_pad * n_pad + 2 * m_pad * input_dim * n_pad
    bytes_accessed = ((h_p.size + x_p.size) * bpe
                      + (params["wh"].size + params["wx"].size) * bpe
                      + params["b"].size * 4
                      + m_pad * n_pad * out_bpe)

    out = pl.pallas_call(
        gate_kernel,
        out_shape=jax.ShapeDtypeStruct((m_pad, n_pad), out_dtype),
        grid_spec=pltpu.PrefetchScalarGridSpec(
            num_scalar_prefetch=0,
            grid=grid,
            in_specs=[
                pl.BlockSpec((tm, tk), lambda i, j, k: (i, k)),          # h
                pl.BlockSpec((tm, input_dim), lambda i, j, k: (i, 0)),   # x (K resident)
                pl.BlockSpec((tk, tn), lambda i, j, k: (k, j)),          # W_h
                pl.BlockSpec((input_dim, tn), lambda i, j, k: (0, j)),   # W_x
                pl.BlockSpec((1, tn), lambda i, j, k: (0, j)),           # b
            ],
            out_specs=pl.BlockSpec((tm, tn), lambda i, j, k: (i, j)),
            scratch_shapes=[pltpu.VMEM((tm, tn), jnp.float32)],
        ),
        compiler_params=pltpu.CompilerParams(
            dimension_semantics=("parallel", "parallel", "arbitrary"),
            vmem_limit_bytes=vmem_limit,
        ),
        cost_estimate=pl.CostEstimate(
            flops=flops,
            transcendentals=m_pad * n_pad,
            bytes_accessed=bytes_accessed,
        ),
    )(h_p, x_p, params["wh"], params["wx"], params["b"])

    return out[:batch, :hidden_dim]


if __name__ == "__main__":
    # Small shapes implied by the forward: x:(B, input_dim), h:(B, hidden_dim)
    batch, input_dim, hidden_dim = 8, 16, 32

    key = jax.random.PRNGKey(0)
    k_x, k_h, k_wh, k_wx = jax.random.split(key, 4)

    # Deterministic parameter init matching the PyTorch module's __init__:
    #   hidden_w: orthogonal (hidden_dim, hidden_dim)
    #   input_w : xavier/glorot uniform (input_dim, hidden_dim)
    #   b       : zeros (hidden_dim,)
    hidden_w = jax.nn.initializers.orthogonal()(k_wh, (hidden_dim, hidden_dim), jnp.float32)
    input_w = jax.nn.initializers.glorot_uniform()(k_wx, (input_dim, hidden_dim), jnp.float32)
    b = jnp.zeros((hidden_dim,), jnp.float32)

    x = jax.random.normal(k_x, (batch, input_dim), jnp.float32)
    h = jax.random.normal(k_h, (batch, hidden_dim), jnp.float32)

    # One-time parameter prep (fused pad/cast happens HERE, not per call).
    params = prepare_gate_params(input_w, hidden_w, b)

    out = gate_forward(params, x, h)
    out = jax.block_until_ready(out)

    # Reference check in plain JAX (f32). Kernel uses bf16 MXU operands with
    # f32 accumulation + approx-reciprocal sigmoid, so compare with a
    # bf16-appropriate tolerance.
    ref = jax.nn.sigmoid(h @ hidden_w + x @ input_w + b)
    assert out.shape == ref.shape, "shape mismatch vs reference"
    assert jnp.allclose(out, ref, atol=2e-2, rtol=1e-2), "mismatch vs reference"

    print("KERNEL_OK")
</pallas_src>

<mosaic_0001>
module attributes {stable_mosaic.version = 11 : i64} {
  func.func @gate_kernel(%arg0: i32, %arg1: i32, %arg2: i32, %arg3: memref<16x128xbf16, #tpu.memory_space<vmem>>, %arg4: memref<16x16xbf16, #tpu.memory_space<vmem>>, %arg5: memref<128x128xbf16, #tpu.memory_space<vmem>>, %arg6: memref<16x128xbf16, #tpu.memory_space<vmem>>, %arg7: memref<1x128xf32, #tpu.memory_space<vmem>>, %arg8: memref<16x128xf32, #tpu.memory_space<vmem>>, %arg9: memref<16x128xf32, #tpu.memory_space<vmem>>) attributes {dimension_semantics = [#tpu.dimension_semantics<parallel>, #tpu.dimension_semantics<parallel>, #tpu.dimension_semantics<arbitrary>], iteration_bounds = array<i64: 1, 1, 1>, scalar_prefetch = 0 : i64, scratch_operands = 1 : i64, tpu.core_type = #tpu.core_type<tc>, window_params = [{transform_indices = @transform_0, window_bounds = array<i64: 16, 128>}, {transform_indices = @transform_1, window_bounds = array<i64: 16, 16>}, {transform_indices = @transform_2, window_bounds = array<i64: 128, 128>}, {transform_indices = @transform_3, window_bounds = array<i64: 16, 128>}, {transform_indices = @transform_4, window_bounds = array<i64: 1, 128>}, {transform_indices = @transform_5, window_bounds = array<i64: 16, 128>}]} {
    %c0_i32 = arith.constant 0 : i32
    %0 = arith.cmpi eq, %arg2, %c0_i32 : i32
    %1 = arith.extui %0 : i1 to i32
    %c0_i32_0 = arith.constant 0 : i32
    %2 = arith.cmpi ne, %1, %c0_i32_0 : i32
    scf.if %2 {
      %c0_10 = arith.constant 0 : index
      %c0_11 = arith.constant 0 : index
      %12 = vector.load %arg4[%c0_10, %c0_11] : memref<16x16xbf16, #tpu.memory_space<vmem>>, vector<16x16xbf16>
      %c0_12 = arith.constant 0 : index
      %c0_13 = arith.constant 0 : index
      %13 = vector.load %arg6[%c0_12, %c0_13] : memref<16x128xbf16, #tpu.memory_space<vmem>>, vector<16x128xbf16>
      %cst_14 = arith.constant dense<0.000000e+00> : vector<16x128xf32>
      %14 = tpu.matmul %12, %13, %cst_14 {dimension_numbers = #tpu.dot_dimension_numbers<[1], [0], [0], [1], [0, 0, 1, 1], [], []>} : vector<16x16xbf16>, vector<16x128xbf16>, vector<16x128xf32> -> vector<16x128xf32>
      %c0_15 = arith.constant 0 : index
      %c0_16 = arith.constant 0 : index
      %15 = vector.load %arg9[%c0_15, %c0_16] : memref<16x128xf32, #tpu.memory_space<vmem>>, vector<16x128xf32>
      tpu.vector_store %arg9[%c0_15, %c0_16], %14 {strides = array<i32>} : memref<16x128xf32, #tpu.memory_space<vmem>>, vector<16x128xf32>,
    } else {
    }
    %c0 = arith.constant 0 : index
    %c0_1 = arith.constant 0 : index
    %3 = vector.load %arg9[%c0, %c0_1] : memref<16x128xf32, #tpu.memory_space<vmem>>, vector<16x128xf32>
    %c0_2 = arith.constant 0 : index
    %c0_3 = arith.constant 0 : index
    %4 = vector.load %arg3[%c0_2, %c0_3] : memref<16x128xbf16, #tpu.memory_space<vmem>>, vector<16x128xbf16>
    %c0_4 = arith.constant 0 : index
    %c0_5 = arith.constant 0 : index
    %5 = vector.load %arg5[%c0_4, %c0_5] : memref<128x128xbf16, #tpu.memory_space<vmem>>, vector<128x128xbf16>
    %cst = arith.constant dense<0.000000e+00> : vector<16x128xf32>
    %6 = tpu.matmul %4, %5, %cst {dimension_numbers = #tpu.dot_dimension_numbers<[1], [0], [0], [1], [0, 0, 1, 1], [], []>} : vector<16x128xbf16>, vector<128x128xbf16>, vector<16x128xf32> -> vector<16x128xf32>
    %7 = arith.addf %3, %6 : vector<16x128xf32>
    %c0_6 = arith.constant 0 : index
    %c0_7 = arith.constant 0 : index
    %8 = vector.load %arg9[%c0_6, %c0_7] : memref<16x128xf32, #tpu.memory_space<vmem>>, vector<16x128xf32>
    tpu.vector_store %arg9[%c0_6, %c0_7], %7 {strides = array<i32>} : memref<16x128xf32, #tpu.memory_space<vmem>>, vector<16x128xf32>,
    %c0_i32_8 = arith.constant 0 : i32
    %9 = arith.cmpi eq, %arg2, %c0_i32_8 : i32
    %10 = arith.extui %9 : i1 to i32
    %c0_i32_9 = arith.constant 0 : i32
    %11 = arith.cmpi ne, %10, %c0_i32_9 : i32
    scf.if %11 {
      %c0_10 = arith.constant 0 : index
      %c0_11 = arith.constant 0 : index
      %12 = vector.load %arg9[%c0_10, %c0_11] : memref<16x128xf32, #tpu.memory_space<vmem>>, vector<16x128xf32>
      %c0_12 = arith.constant 0 : index
      %c0_13 = arith.constant 0 : index
      %13 = vector.load %arg7[%c0_12, %c0_13] : memref<1x128xf32, #tpu.memory_space<vmem>>, vector<1x128xf32>
      %14 = vector.broadcast %13 : vector<1x128xf32> to vector<16x128xf32>
      %15 = arith.addf %12, %14 : vector<16x128xf32>
      %cst_14 = arith.constant 0.000000e+00 : f32
      %16 = vector.broadcast %cst_14 : f32 to vector<16x128xf32>
      %17 = arith.subf %16, %15 : vector<16x128xf32>
      %18 = math.exp %17 : vector<16x128xf32>
      %cst_15 = arith.constant 1.000000e+00 : f32
      %19 = vector.broadcast %cst_15 : f32 to vector<16x128xf32>
      %20 = arith.addf %19, %18 : vector<16x128xf32>
      %21 = tpu.reciprocal %20 {approx = true} : vector<16x128xf32> -> vector<16x128xf32>
      %c0_16 = arith.constant 0 : index
      %c0_17 = arith.constant 0 : index
      %22 = vector.load %arg8[%c0_16, %c0_17] : memref<16x128xf32, #tpu.memory_space<vmem>>, vector<16x128xf32>
      tpu.vector_store %arg8[%c0_16, %c0_17], %21 {strides = array<i32>} : memref<16x128xf32, #tpu.memory_space<vmem>>, vector<16x128xf32>,
    } else {
    }
    return
  }
  func.func @transform_0(%arg0: i32, %arg1: i32, %arg2: i32) -> (i32, i32) {
    %c0_i32 = arith.constant 0 : i32
    return %arg0, %arg2 : i32, i32
  }
  func.func @transform_1(%arg0: i32, %arg1: i32, %arg2: i32) -> (i32, i32) {
    %c0_i32 = arith.constant 0 : i32
    %c0_i32_0 = arith.constant 0 : i32
    return %arg0, %c0_i32 : i32, i32
  }
  func.func @transform_2(%arg0: i32, %arg1: i32, %arg2: i32) -> (i32, i32) {
    %c0_i32 = arith.constant 0 : i32
    return %arg2, %arg1 : i32, i32
  }
  func.func @transform_3(%arg0: i32, %arg1: i32, %arg2: i32) -> (i32, i32) {
    %c0_i32 = arith.constant 0 : i32
    %c0_i32_0 = arith.constant 0 : i32
    return %c0_i32, %arg1 : i32, i32
  }
  func.func @transform_4(%arg0: i32, %arg1: i32, %arg2: i32) -> (i32, i32) {
    %c0_i32 = arith.constant 0 : i32
    %c0_i32_0 = arith.constant 0 : i32
    return %c0_i32, %arg1 : i32, i32
  }
  func.func @transform_5(%arg0: i32, %arg1: i32, %arg2: i32) -> (i32, i32) {
    %c0_i32 = arith.constant 0 : i32
    return %arg0, %arg1 : i32, i32
  }
}

</mosaic_0001>

<llo_original>
// kernel: tpu_custom_call.1
$region0: #{tpu_custom_call.1}
  #allocation0 [shape = 'u32[]', space=smem, size = 0x4, offset = 0x4, fixed_abs, tag = 'smem constant byte address 0x4 - core index']
  #allocation1 [shape = 'u32[72,128]{1,0:T(1,128)}', space=vmem, size = 0x9000, scoped, tag = 'internal scratch']
  #allocation2 [shape = 'f32[16,128]{1,0:T(8,128)}', space=vmem, size = 0x2000, scoped, tag = 'scratch operand']
  %s0 = inlined_call_operand.hbm [shape: bf16[16,128], index: 0, kind: input, shape index: {}]
  %s1 = inlined_call_operand.hbm [shape: bf16[16,16], index: 1, kind: input, shape index: {}]
  %s2 = inlined_call_operand.hbm [shape: bf16[128,128], index: 2, kind: input, shape index: {}]
  %s3 = inlined_call_operand.hbm [shape: bf16[16,128], index: 3, kind: input, shape index: {}]
  %s4 = inlined_call_operand.vmem [shape: f32[1,128], index: 4, kind: input, shape index: {}]
  %s5 = inlined_call_operand.hbm [shape: f32[16,128], index: 5, kind: output, shape index: {}]
  %s6 = sld [smem:[#allocation0]]
  $region54: #{tpu_custom_call.1} parent=0
    _
  %s8 = ssub.s32 1, %s6
  %s9 = scalar_select 0, %s8, %s6
  $region1: #{tpu_custom_call.1} parent=0
    #allocation3 [shape = 'u8[4096]{0}', space=vmem, size = 0x1000, scoped, tag = 'input window, operand 0, single buffered']
    #allocation4 [shape = 's32[1]{0}', space=sflag, size = 0x4, scoped, tag = 'scoped memory for tpu_custom_call.1']
    #allocation5 [shape = 's32[1]{0}', space=sflag, size = 0x4, scoped, tag = 'scoped memory for tpu_custom_call.1']
    #allocation6 [shape = 'u8[4096]{0}', space=vmem, size = 0x1000, scoped, tag = 'input window, operand 1, single buffered']
    #allocation7 [shape = 's32[1]{0}', space=sflag, size = 0x4, scoped, tag = 'scoped memory for tpu_custom_call.1']
    #allocation8 [shape = 'u8[32768]{0}', space=vmem, size = 0x8000, scoped, tag = 'input window, operand 2, single buffered']
    #allocation9 [shape = 'u8[4096]{0}', space=vmem, size = 0x1000, scoped, tag = 'input window, operand 3, single buffered']
    #allocation10 [shape = 's32[1]{0}', space=sflag, size = 0x4, scoped, tag = 'scoped memory for tpu_custom_call.1']
    #allocation11 [shape = 'u8[8192]{0}', space=vmem, size = 0x2000, scoped, tag = 'output window, operand 0, single buffered']
    %10 = vsyncpa [#allocation4], 0
    %11 = vsyncpa [#allocation7], 0
    %12 = vsyncpa [#allocation10], 0
    %13 = vsyncpa [#allocation5], 0
    // Predicated region
    $region2: #{tpu_custom_call.1} parent=1 // pred_check
      _
    $region3: #{tpu_custom_call.1} parent=1 // pred_check_branch
      %15 = sbr.rel (0) target = $region5
    $region4: #{tpu_custom_call.1} parent=1 // pred_region
      %17 = vsyncadd [#allocation4], 0
      %s18 = sshll.u32 %s0, 4
      %s19 = int_to_ptr.hbm [resolvable:$true] %s18
      %s20 = sshll.u32 [#allocation3], 4
      %s21 = int_to_ptr.vmem [resolvable:$true] %s20
      %26 = dma.hbm_to_vmem [thread:$0]  %s19, 128, %s21, [#allocation4], 64, 64, 4
    $region5: #{tpu_custom_call.1} parent=1 // pred_fallthru
      _
    // Predicated region
    $region6: #{tpu_custom_call.1} parent=1 // pred_check
      _
    $region7: #{tpu_custom_call.1} parent=1 // pred_check_branch
      %28 = sbr.rel (0) target = $region9
    $region8: #{tpu_custom_call.1} parent=1 // pred_region
      %30 = vsyncadd [#allocation7], 0
      %s31 = sshll.u32 %s1, 4
      %s32 = int_to_ptr.hbm [resolvable:$true] %s31
      %s33 = sshll.u32 [#allocation6], 4
      %s34 = int_to_ptr.vmem [resolvable:$true] %s33
      %39 = dma.hbm_to_vmem [thread:$0]  %s32, 128, %s34, [#allocation7], 64, 64, 4
    $region9: #{tpu_custom_call.1} parent=1 // pred_fallthru
      _
    // Predicated region
    $region10: #{tpu_custom_call.1} parent=1 // pred_check
      _
    $region11: #{tpu_custom_call.1} parent=1 // pred_check_branch
      %41 = sbr.rel (0) target = $region13
    $region12: #{tpu_custom_call.1} parent=1 // pred_region
      %43 = vsyncadd [#allocation7], 0
      %s44 = sshll.u32 %s2, 4
      %s45 = int_to_ptr.hbm [resolvable:$true] %s44
      %s46 = sshll.u32 [#allocation8], 4
      %s47 = int_to_ptr.vmem [resolvable:$true] %s46
      %52 = dma.hbm_to_vmem [thread:$0]  %s45, 1024, %s47, [#allocation7], 64, 64, 4
    $region13: #{tpu_custom_call.1} parent=1 // pred_fallthru
      _
    // Predicated region
    $region14: #{tpu_custom_call.1} parent=1 // pred_check
      _
    $region15: #{tpu_custom_call.1} parent=1 // pred_check_branch
      %54 = sbr.rel (0) target = $region17
    $region16: #{tpu_custom_call.1} parent=1 // pred_region
      %56 = vsyncadd [#allocation10], 0
      %s57 = sshll.u32 %s3, 4
      %s58 = int_to_ptr.hbm [resolvable:$true] %s57
      %s59 = sshll.u32 [#allocation9], 4
      %s60 = int_to_ptr.vmem [resolvable:$true] %s59
      %65 = dma.hbm_to_vmem [thread:$0]  %s58, 128, %s60, [#allocation10], 64, 64, 4
    $region17: #{tpu_custom_call.1} parent=1 // pred_fallthru
      _
    // Predicated region
    $region18: #{tpu_custom_call.1} parent=1 // pred_check
      _
    $region19: #{tpu_custom_call.1} parent=1 // pred_check_branch
      %67 = sbr.rel (0) target = $region21
    $region20: #{tpu_custom_call.1} parent=1 // pred_region
      _
    $region21: #{tpu_custom_call.1} parent=1 // pred_fallthru
      _
    // Predicated region
    $region22: #{tpu_custom_call.1} parent=1 // pred_check
      _
    $region23: #{tpu_custom_call.1} parent=1 // pred_check_branch
      %69 = sbr.rel (0) target = $region25
    $region24: #{tpu_custom_call.1} parent=1 // pred_region
      %71 = dma.done [#allocation4], 128
    $region25: #{tpu_custom_call.1} parent=1 // pred_fallthru
      _
    // Predicated region
    $region26: #{tpu_custom_call.1} parent=1 // pred_check
      _
    $region27: #{tpu_custom_call.1} parent=1 // pred_check_branch
      %73 = sbr.rel (0) target = $region29
    $region28: #{tpu_custom_call.1} parent=1 // pred_region
      %75 = dma.done [#allocation7], 128
    $region29: #{tpu_custom_call.1} parent=1 // pred_fallthru
      _
    // Predicated region
    $region30: #{tpu_custom_call.1} parent=1 // pred_check
      _
    $region31: #{tpu_custom_call.1} parent=1 // pred_check_branch
      %77 = sbr.rel (0) target = $region33
    $region32: #{tpu_custom_call.1} parent=1 // pred_region
      %79 = dma.done [#allocation7], 1024
    $region33: #{tpu_custom_call.1} parent=1 // pred_fallthru
      _
    // Predicated region
    $region34: #{tpu_custom_call.1} parent=1 // pred_check
      _
    $region35: #{tpu_custom_call.1} parent=1 // pred_check_branch
      %81 = sbr.rel (0) target = $region37
    $region36: #{tpu_custom_call.1} parent=1 // pred_region
      %83 = dma.done [#allocation10], 128
    $region37: #{tpu_custom_call.1} parent=1 // pred_fallthru
      _
    %p85 = scmp.eq.s32.totalorder 0, 0
    // Predicated region
    $region38: #{tpu_custom_call.1} parent=1 // pred_check
      %p86 = pneg %p85
    $region39: #{tpu_custom_call.1} parent=1 // pred_check_branch
      %88 = sbr.rel (%p86) target = $region41
    $region40: #{tpu_custom_call.1} parent=1 // pred_region
      %v89 = vld [vmem:[#allocation6] sm:$0xf]
      %v90 = vld [vmem:[#allocation6 + $0x4] sm:$0xf]
      %v91 = vld [vmem:[#allocation9] sm:$0xf]
      %v92 = vld [vmem:[#allocation9 + $0x4] sm:$0xf]
      %v95 = vunpack.c.l.b16 %v89
      %v96 = vunpack.c.l.b16 %v90
      %v97 = vpack.c.b16 %v96, %v95
      %v100 = vunpack.c.l.b16 %v91
      %v101 = vunpack.c.l.b16 %v92
      %v102 = vpack.c.b16 %v101, %v100
      %vm104 = vcmask 130048
      %v106 = vsel %vm104, %v97, 0
      %108 = vmatpush.bf16.msra.mxu0 0
      %109 = vmatpush.bf16.msra.mxu0 0
      %110 = vmatpush.bf16.msra.mxu0 0
      %111 = vmatpush.bf16.msra.mxu0 0
      %112 = vmatpush.bf16.msra.mxu0 0
      %113 = vmatpush.bf16.msra.mxu0 0
      %114 = vmatpush.bf16.msra.mxu0 0
      %115 = vmatpush.bf16.msra.mxu0 %v102
      %116 = vmatmul.bf16.gmra.mxu0 %v106
      %v117 = vpop.f32.mrf.mxu0
      %v118 = vadd.f32 0.0, %v117
      %v119 = vpop.f32.mrf.mxu0
      %v120 = vadd.f32 0.0, %v119
      %121 = vdwg.mxu0
      %122 = vst [vmem:[#allocation2] sm:$0xff] %v118
      %123 = vst [vmem:[#allocation2 + $0x8] sm:$0xff] %v120
    $region41: #{tpu_custom_call.1} parent=1 // pred_fallthru
      _
    %v124 = vld [vmem:[#allocation2] sm:$0xff]
    %v125 = vld [vmem:[#allocation2 + $0x8] sm:$0xff]
    %v126 = vld [vmem:[#allocation3] sm:$0xf]
    %v127 = vld [vmem:[#allocation3 + $0x4] sm:$0xf]
    %v128 = vld [vmem:[#allocation8] sm:$0xf]
    %v129 = vld [vmem:[#allocation8 + $0x4] sm:$0xf]
    %v130 = vld [vmem:[#allocation8 + $0x8] sm:$0xf]
    %v131 = vld [vmem:[#allocation8 + $0xc] sm:$0xf]
    %v132 = vld [vmem:[#allocation8 + $0x10] sm:$0xf]
    %v133 = vld [vmem:[#allocation8 + $0x14] sm:$0xf]
    %v134 = vld [vmem:[#allocation8 + $0x18] sm:$0xf]
    %v135 = vld [vmem:[#allocation8 + $0x1c] sm:$0xf]
    %v136 = vld [vmem:[#allocation8 + $0x20] sm:$0xf]
    %v137 = vld [vmem:[#allocation8 + $0x24] sm:$0xf]
    %v138 = vld [vmem:[#allocation8 + $0x28] sm:$0xf]
    %v139 = vld [vmem:[#allocation8 + $0x2c] sm:$0xf]
    %v140 = vld [vmem:[#allocation8 + $0x30] sm:$0xf]
    %v141 = vld [vmem:[#allocation8 + $0x34] sm:$0xf]
    %v142 = vld [vmem:[#allocation8 + $0x38] sm:$0xf]
    %v143 = vld [vmem:[#allocation8 + $0x3c] sm:$0xf]
    %v146 = vunpack.c.l.b16 %v126
    %v147 = vunpack.c.l.b16 %v127
    %v148 = vpack.c.b16 %v147, %v146
    %v166 = vunpack.c.l.b16 %v128
    %v167 = vunpack.c.l.b16 %v129
    %v168 = vunpack.c.l.b16 %v130
    %v169 = vunpack.c.l.b16 %v131
    %v170 = vunpack.c.l.b16 %v132
    %v171 = vunpack.c.l.b16 %v133
    %v172 = vunpack.c.l.b16 %v134
    %v173 = vunpack.c.l.b16 %v135
    %v174 = vunpack.c.l.b16 %v136
    %v175 = vunpack.c.l.b16 %v137
    %v176 = vunpack.c.l.b16 %v138
    %v177 = vunpack.c.l.b16 %v139
    %v178 = vunpack.c.l.b16 %v140
    %v179 = vunpack.c.l.b16 %v141
    %v180 = vunpack.c.l.b16 %v142
    %v181 = vunpack.c.l.b16 %v143
    %v182 = vpack.c.b16 %v167, %v166
    %v183 = vpack.c.b16 %v169, %v168
    %v184 = vpack.c.b16 %v171, %v170
    %v185 = vpack.c.b16 %v173, %v172
    %v186 = vpack.c.b16 %v175, %v174
    %v187 = vpack.c.b16 %v177, %v176
    %v188 = vpack.c.b16 %v179, %v178
    %v189 = vpack.c.b16 %v181, %v180
    %198 = vmatpush.bf16.msra.mxu0 %v189
    %199 = vmatpush.bf16.msra.mxu0 %v188
    %200 = vmatpush.bf16.msra.mxu0 %v187
    %201 = vmatpush.bf16.msra.mxu0 %v186
    %202 = vmatpush.bf16.msra.mxu0 %v185
    %203 = vmatpush.bf16.msra.mxu0 %v184
    %204 = vmatpush.bf16.msra.mxu0 %v183
    %205 = vmatpush.bf16.msra.mxu0 %v182
    %206 = vmatmul.bf16.gmra.mxu0 %v148
    %v207 = vpop.f32.mrf.mxu0
    %v208 = vadd.f32 0.0, %v207
    %v209 = vpop.f32.mrf.mxu0
    %v210 = vadd.f32 0.0, %v209
    %211 = vdwg.mxu0
    %v212 = vadd.f32 %v124, %v208
    %v213 = vadd.f32 %v125, %v210
    %214 = vst [vmem:[#allocation2] sm:$0xff] %v212
    %215 = vst [vmem:[#allocation2 + $0x8] sm:$0xff] %v213
    // Predicated region
    $region42: #{tpu_custom_call.1} parent=1 // pred_check
      %p216 = pneg %p85
    $region43: #{tpu_custom_call.1} parent=1 // pred_check_branch
      %218 = sbr.rel (%p216) target = $region45
    $region44: #{tpu_custom_call.1} parent=1 // pred_region
      %v219 = vld [vmem:[#allocation2] sm:$0xff]
      %v220 = vld [vmem:[#allocation2 + $0x8] sm:$0xff]
      %v221 = vld [vmem:[%s4] sm:$0x1]
      %v223 = vperm.slane %v221, 0
      %v225 = vadd.f32 %v219, %v223
      %v226 = vadd.f32 %v220, %v223
      %v227 = vsub.f32 0.0, %v225
      %v228 = vsub.f32 0.0, %v226
      %v229 = vmul.f32 %v227, 1.442695
      %v230 = vpow.pop %v229
      %v231 = vmul.f32 %v228, 1.442695
      %v232 = vpow.pop %v231
      %v233 = vadd.f32 %v230, 1.0
      %v234 = vadd.f32 %v232, 1.0
      %v235 = vrcp.pop %v233
      %v236 = vrcp.pop %v234
      %237 = vst [vmem:[#allocation11] sm:$0xff] %v235
      %238 = vst [vmem:[#allocation11 + $0x8] sm:$0xff] %v236
    $region45: #{tpu_custom_call.1} parent=1 // pred_fallthru
      _
    // Predicated region
    $region46: #{tpu_custom_call.1} parent=1 // pred_check
      _
    $region47: #{tpu_custom_call.1} parent=1 // pred_check_branch
      %240 = sbr.rel (0) target = $region49
    $region48: #{tpu_custom_call.1} parent=1 // pred_region
      %242 = vsyncadd [#allocation5], 0
      %s243 = sshll.u32 [#allocation11], 4
      %s244 = int_to_ptr.vmem [resolvable:$true] %s243
      %s245 = sshll.u32 %s5, 4
      %s246 = int_to_ptr.hbm [resolvable:$true] %s245
      %251 = dma.vmem_to_hbm [thread:$0]  %s244, 256, %s246, [#allocation5], 128, 128, 8
    $region49: #{tpu_custom_call.1} parent=1 // pred_fallthru
      _
    // Predicated region
    $region50: #{tpu_custom_call.1} parent=1 // pred_check
      _
    $region51: #{tpu_custom_call.1} parent=1 // pred_check_branch
      %253 = sbr.rel (0) target = $region53
    $region52: #{tpu_custom_call.1} parent=1 // pred_region
      %255 = dma.done [#allocation5], 256
    $region53: #{tpu_custom_call.1} parent=1 // pred_fallthru
      _
    %256 = vsyncpa [#allocation4], 1
    %257 = vsyncpa [#allocation7], 1
    %258 = vsyncpa [#allocation10], 1
    %259 = vsyncpa [#allocation5], 1

</llo_original>
